<compile_context>
chip_gen: v7x
topology: tpu7x:2x2x1
jax: 0.10.0
libtpu: 0.0.40
codegen_flags: <defaults>
</compile_context>

<pallas_src>
import functools
import math

import jax
import jax.numpy as jnp
from jax.experimental import pallas as pl
from jax.experimental.pallas import tpu as pltpu


def _cdiv(a, b):
    return -(-a // b)


def _round_up(x, m):
    return _cdiv(x, m) * m


def _query_vmem_capacity():
    """Physical VMEM per core (128 MiB on v5e/v6e, 64 MiB on v7x)."""
    try:
        info = pltpu.get_tpu_info()
        cap = getattr(info, "vmem_capacity_bytes", None)
        if cap:
            return int(cap)
    except Exception:
        pass
    return 64 << 20  # conservative (v7x-sized) fallback


_VMEM_CAP = _query_vmem_capacity()
# Budget for the kernel's tiles; leaves headroom for Mosaic-internal scratch.
# ~45 MiB on v7x (64 MiB physical), ~90 MiB on v5e/v6e (128 MiB physical).
_VMEM_BUDGET = max(24 << 20, int(_VMEM_CAP * 0.70))

_PRECISIONS = {
    "default": jax.lax.Precision.DEFAULT,   # 1 bf16 MXU pass, f32 accumulate
    "high": jax.lax.Precision.HIGH,         # 3 passes
    "highest": jax.lax.Precision.HIGHEST,   # 6 passes (f32-exact parity)
}


# ----------------------------- kernels --------------------------------------


def _linear_kernel(x_ref, w_ref, b_ref, o_ref, *, col_axis, tn, precision):
    # x_ref: (tm, K), w_ref: (K, tn), b_ref: (1, N_pad), o_ref: (tm, tn)
    acc = jnp.dot(x_ref[...], w_ref[...],
                  preferred_element_type=jnp.float32, precision=precision)
    c = pl.multiple_of(pl.program_id(col_axis) * tn, tn)
    bias = b_ref[:, pl.ds(c, tn)].astype(jnp.float32)
    o_ref[...] = (acc + bias).astype(o_ref.dtype)


def _linear_kernel_ksplit(x_ref, w_ref, b_ref, o_ref, acc_ref, *,
                          col_axis, k_axis, tn, precision):
    # x_ref: (tm, tk), w_ref: (tk, tn), acc_ref: (tm, tn) f32 scratch.
    k = pl.program_id(k_axis)

    @pl.when(k == 0)
    def _():
        acc_ref[...] = jnp.zeros_like(acc_ref)

    acc_ref[...] += jnp.dot(x_ref[...], w_ref[...],
                            preferred_element_type=jnp.float32,
                            precision=precision)

    @pl.when(k == pl.num_programs(k_axis) - 1)
    def _():
        c = pl.multiple_of(pl.program_id(col_axis) * tn, tn)
        bias = b_ref[:, pl.ds(c, tn)].astype(jnp.float32)
        o_ref[...] = (acc_ref[...] + bias).astype(o_ref.dtype)


# --------------------------- tile selection ----------------------------------


def _legal_tns(n_pad, cap=512):
    """Column tiles: the full dim, or multiples of 128 dividing n_pad (desc)."""
    if n_pad % 128 != 0:
        return [n_pad]  # only the full-dim block is a legal tile
    vals = {t for t in range(128, min(n_pad, cap) + 1, 128) if n_pad % t == 0}
    if n_pad <= cap:
        vals.add(n_pad)
    return sorted(vals, reverse=True)


def _tm_candidates(m, cap=512):
    t = _round_up(min(m, cap), 8)
    out = [t]
    while t > 128:
        t = max(128, _round_up(t // 2, 8))
        out.append(t)
    return out


def _pick_config(m, k, n_pad, budget, itemsize=4):
    """Weight-resident if it fits, else tiled full-K, else K-split."""

    def tile_bytes(tm, tn, tk):
        b = 2 * itemsize * (tm * tk + tk * tn + tm * tn)  # double-buffered tiles
        b += 2 * itemsize * n_pad                         # constant bias block
        if tk != k:
            b += itemsize * tm * tn                       # f32 accumulator
        return b

    # 1) Weight resident in VMEM: single column block -> W is DMA'd once.
    for tm in _tm_candidates(m):
        by = tile_bytes(tm, n_pad, k)
        if by <= budget:
            return dict(mode="simple", tm=tm, tn=n_pad, tk=k, bytes=by)

    # 2) Full-K tiles, lane-dense column tiles.
    for tn in _legal_tns(n_pad):
        for tm in _tm_candidates(m):
            by = tile_bytes(tm, tn, k)
            if by <= budget:
                return dict(mode="simple", tm=tm, tn=tn, tk=k, bytes=by)

    # 3) K-split with an f32 VMEM accumulator (very large input_size).
    tks = sorted((t for t in range(128, k, 128) if k % t == 0), reverse=True)
    for tk in tks:
        for tn in _legal_tns(n_pad):
            for tm in _tm_candidates(m):
                by = tile_bytes(tm, tn, tk)
                if by <= budget:
                    return dict(mode="ksplit", tm=tm, tn=tn, tk=tk, bytes=by)

    # TODO(synk): pad K to a multiple of 128 at init when K has no suitable
    # divisor so the K-split path can always engage; fall back to minimal tiles.
    tn = _legal_tns(n_pad)[-1]
    return dict(mode="simple", tm=128, tn=tn, tk=k, bytes=tile_bytes(128, tn, k))


# ------------------------------- wrapper -------------------------------------


@functools.partial(jax.jit, static_argnames=("out_features", "precision"))
def linear_overtime(x, w_kn, bias, *, out_features=None, precision="default"):
    """y = (x.reshape(-1, K) @ w_kn + bias).reshape(T, B, N).

    x:     (T, B, K) activations.
    w_kn:  (K, N_pad) nn.Linear weight, pre-transposed (and column-padded to a
           multiple of 128) once at init — never per call.
    bias:  (N_pad,).
    out_features: true hidden_size N (padding columns are sliced off).
    precision: "default" (1 bf16 MXU pass), "high", or "highest" (f32 parity).
    """
    T, B, K = x.shape
    K2, N_pad = w_kn.shape
    assert K2 == K, "w_kn must be (input_size, hidden_size[_padded])"
    N = N_pad if out_features is None else int(out_features)
    M = T * B

    prec = _PRECISIONS[precision] if isinstance(precision, str) else precision

    # No host-side pad of x / slice of the output along M: grid = cdiv(M, tm)
    # and Pallas masks the ragged last row block.
    x2d = x.reshape(M, K)
    b2d = bias.reshape(1, N_pad)

    cfg = _pick_config(M, K, N_pad, _VMEM_BUDGET)
    tm, tn, tk, mode = cfg["tm"], cfg["tn"], cfg["tk"], cfg["mode"]
    gm, gn = _cdiv(M, tm), N_pad // tn

    # v7x shards "parallel" grid axes across its two TensorCores; expose >=2
    # tiles for non-trivial problems (skip tiny latency-bound shapes).
    if gm * gn == 1 and M >= 256:
        tm = max(128, _round_up(_cdiv(M, 2), 8))
        gm = _cdiv(M, tm)

    flops = 2 * M * N_pad * K
    vmem_limit = int(min(max(cfg["bytes"] + (8 << 20), 32 << 20),
                         _VMEM_CAP - (8 << 20)))

    if mode == "simple":
        # Grid order chosen by HBM traffic:
        #  order A (cols innermost): x tile resident across the column sweep,
        #                            W re-read gm times.
        #  order B (rows innermost): W tile resident, x re-read gn times.
        w_retraffic = gm * K * N_pad
        x_retraffic = gn * M * K
        if gn == 1 or w_retraffic <= x_retraffic:
            grid = (gm, gn)
            col_axis = 1
            in_specs = [
                pl.BlockSpec((tm, K), lambda i, j: (i, 0)),
                pl.BlockSpec((K, tn), lambda i, j: (0, j)),
                pl.BlockSpec((1, N_pad), lambda i, j: (0, 0)),
            ]
            out_spec = pl.BlockSpec((tm, tn), lambda i, j: (i, j))
            bytes_accessed = 4 * (M * K + w_retraffic + M * N_pad)
        else:
            grid = (gn, gm)
            col_axis = 0
            in_specs = [
                pl.BlockSpec((tm, K), lambda j, i: (i, 0)),
                pl.BlockSpec((K, tn), lambda j, i: (0, j)),
                pl.BlockSpec((1, N_pad), lambda j, i: (0, 0)),
            ]
            out_spec = pl.BlockSpec((tm, tn), lambda j, i: (i, j))
            bytes_accessed = 4 * (x_retraffic + K * N_pad + M * N_pad)
        kernel = functools.partial(_linear_kernel, col_axis=col_axis, tn=tn,
                                   precision=prec)
        grid_spec = pltpu.PrefetchScalarGridSpec(
            num_scalar_prefetch=0, grid=grid,
            in_specs=in_specs, out_specs=out_spec)
        dim_sem = ("parallel", "parallel")
    else:  # K-split: 3rd grid axis ("arbitrary", innermost) + f32 accumulator.
        gk = K // tk
        grid = (gm, gn, gk)
        kernel = functools.partial(_linear_kernel_ksplit, col_axis=1, k_axis=2,
                                   tn=tn, precision=prec)
        in_specs = [
            pl.BlockSpec((tm, tk), lambda i, j, kk: (i, kk)),
            pl.BlockSpec((tk, tn), lambda i, j, kk: (kk, j)),
            pl.BlockSpec((1, N_pad), lambda i, j, kk: (0, 0)),
        ]
        out_spec = pl.BlockSpec((tm, tn), lambda i, j, kk: (i, j))
        grid_spec = pltpu.PrefetchScalarGridSpec(
            num_scalar_prefetch=0, grid=grid,
            in_specs=in_specs, out_specs=out_spec,
            scratch_shapes=[pltpu.VMEM((tm, tn), jnp.float32)])
        dim_sem = ("parallel", "parallel", "arbitrary")
        bytes_accessed = 4 * (gn * M * K + gm * K * N_pad + M * N_pad)

    # TODO(synk): if profiling shows the fastest-streaming operand's DMA is
    # exposed under "default" precision, add pipeline_mode=pl.Buffered(3) to it.

    out2d = pl.pallas_call(
        kernel,
        out_shape=jax.ShapeDtypeStruct((M, N_pad), x.dtype),
        grid_spec=grid_spec,
        compiler_params=pltpu.CompilerParams(
            dimension_semantics=dim_sem,
            vmem_limit_bytes=vmem_limit),
        cost_estimate=pl.CostEstimate(flops=int(flops), transcendentals=0,
                                      bytes_accessed=int(bytes_accessed)),
    )(x2d, w_kn, b2d)

    if N != N_pad:
        out2d = out2d[:, :N]
    return out2d.reshape(T, B, N)


# ------------------------------- init ----------------------------------------


def init_linear_params(key, input_size, hidden_size, dtype=jnp.float32):
    """Deterministic init matching nn.Linear's U(-1/sqrt(in), 1/sqrt(in)).

    Returns (weight (N,K), bias (N,)) for the reference math, plus the
    kernel-side parameters prepared ONCE here: w_kn (K, N_pad) pre-transposed
    and zero-padded to a lane-dense multiple of 128, and bias_pad (N_pad,).
    """
    kw, kb = jax.random.split(key)
    bound = 1.0 / math.sqrt(input_size)
    weight = jax.random.uniform(kw, (hidden_size, input_size), dtype,
                                minval=-bound, maxval=bound)
    bias = jax.random.uniform(kb, (hidden_size,), dtype,
                              minval=-bound, maxval=bound)
    n_pad = _round_up(hidden_size, 128)
    w_kn = jnp.zeros((input_size, n_pad), dtype).at[:, :hidden_size].set(weight.T)
    bias_pad = jnp.zeros((n_pad,), dtype).at[:hidden_size].set(bias)
    return weight, bias, w_kn, bias_pad


if __name__ == "__main__":
    # Small shapes: seq T=8, batch B=2, input_size=16, hidden_size=32
    T, B, input_size, hidden_size = 8, 2, 16, 32

    key = jax.random.PRNGKey(0)
    kx, kp = jax.random.split(key)
    x = jax.random.normal(kx, (T, B, input_size), dtype=jnp.float32)
    weight, bias, w_kn, bias_pad = init_linear_params(kp, input_size, hidden_size)

    # Reference (plain JAX, full-f32) with the same semantics as the module:
    #   y = fc(x.view(-1, K)).view(T, B, N)
    y_ref = (jnp.dot(x.reshape(-1, input_size), weight.T,
                     precision=jax.lax.Precision.HIGHEST) + bias
             ).reshape(T, B, hidden_size)

    # f32-exact parity path.
    y = linear_overtime(x, w_kn, bias_pad, out_features=hidden_size,
                        precision="highest")
    y = jax.block_until_ready(y)
    assert y.shape == (T, B, hidden_size)
    assert jnp.allclose(y, y_ref, atol=1e-5, rtol=1e-5)

    # Default fast path (single bf16 MXU pass) — looser tolerance.
    y_fast = linear_overtime(x, w_kn, bias_pad, out_features=hidden_size)
    y_fast = jax.block_until_ready(y_fast)
    assert y_fast.shape == (T, B, hidden_size)
    assert jnp.allclose(y_fast, y_ref, atol=1e-1, rtol=1e-1)

    print("KERNEL_OK")
</pallas_src>

<mosaic_0001>
module attributes {stable_mosaic.version = 11 : i64} {
  func.func @_linear_kernel(%arg0: i32, %arg1: i32, %arg2: memref<16x16xf32, #tpu.memory_space<vmem>>, %arg3: memref<16x128xf32, #tpu.memory_space<vmem>>, %arg4: memref<1x128xf32, #tpu.memory_space<vmem>>, %arg5: memref<16x128xf32, #tpu.memory_space<vmem>>) attributes {dimension_semantics = [#tpu.dimension_semantics<parallel>, #tpu.dimension_semantics<parallel>], iteration_bounds = array<i64: 1, 1>, scalar_prefetch = 0 : i64, scratch_operands = 0 : i64, tpu.core_type = #tpu.core_type<tc>, window_params = [{transform_indices = @transform_0, window_bounds = array<i64: 16, 16>}, {transform_indices = @transform_1, window_bounds = array<i64: 16, 128>}, {pipeline_mode = #tpu.pipeline_mode<synchronous>, transform_indices = @transform_2, window_bounds = array<i64: 1, 128>}, {transform_indices = @transform_3, window_bounds = array<i64: 16, 128>}]} {
    %c0 = arith.constant 0 : index
    %c0_0 = arith.constant 0 : index
    %0 = vector.load %arg2[%c0, %c0_0] : memref<16x16xf32, #tpu.memory_space<vmem>>, vector<16x16xf32>
    %c0_1 = arith.constant 0 : index
    %c0_2 = arith.constant 0 : index
    %1 = vector.load %arg3[%c0_1, %c0_2] : memref<16x128xf32, #tpu.memory_space<vmem>>, vector<16x128xf32>
    %cst = arith.constant dense<0.000000e+00> : vector<16x128xf32>
    %2 = tpu.matmul %0, %1, %cst {dimension_numbers = #tpu.dot_dimension_numbers<[1], [0], [0], [1], [0, 0, 1, 1], [], []>, precision = #tpu.contract_precision<fp32>} : vector<16x16xf32>, vector<16x128xf32>, vector<16x128xf32> -> vector<16x128xf32>
    %c128_i32 = arith.constant 128 : i32
    %3 = arith.muli %arg1, %c128_i32 : i32
    %4 = tpu.assume_multiple %3, 128 : i32
    %c0_3 = arith.constant 0 : index
    %5 = arith.index_cast %4 : i32 to index
    %6 = vector.load %arg4[%c0_3, %5] : memref<1x128xf32, #tpu.memory_space<vmem>>, vector<1x128xf32>
    %7 = vector.broadcast %6 : vector<1x128xf32> to vector<16x128xf32>
    %8 = arith.addf %2, %7 : vector<16x128xf32>
    %c0_4 = arith.constant 0 : index
    %c0_5 = arith.constant 0 : index
    %9 = vector.load %arg5[%c0_4, %c0_5] : memref<16x128xf32, #tpu.memory_space<vmem>>, vector<16x128xf32>
    tpu.vector_store %arg5[%c0_4, %c0_5], %8 {strides = array<i32>} : memref<16x128xf32, #tpu.memory_space<vmem>>, vector<16x128xf32>,
    return
  }
  func.func @transform_0(%arg0: i32, %arg1: i32) -> (i32, i32) {
    %c0_i32 = arith.constant 0 : i32
    %c0_i32_0 = arith.constant 0 : i32
    return %arg0, %c0_i32 : i32, i32
  }
  func.func @transform_1(%arg0: i32, %arg1: i32) -> (i32, i32) {
    %c0_i32 = arith.constant 0 : i32
    %c0_i32_0 = arith.constant 0 : i32
    return %c0_i32, %arg1 : i32, i32
  }
  func.func @transform_2(%arg0: i32, %arg1: i32) -> (i32, i32) {
    %c0_i32 = arith.constant 0 : i32
    %c0_i32_0 = arith.constant 0 : i32
    %c0_i32_1 = arith.constant 0 : i32
    return %c0_i32, %c0_i32_0 : i32, i32
  }
  func.func @transform_3(%arg0: i32, %arg1: i32) -> (i32, i32) {
    %c0_i32 = arith.constant 0 : i32
    return %arg0, %arg1 : i32, i32
  }
}

</mosaic_0001>

<llo_original>
// kernel: linear_overtime.1
$region0: #{linear_overtime.1}
  #allocation0 [shape = 'u32[]', space=smem, size = 0x4, offset = 0x4, fixed_abs, tag = 'smem constant byte address 0x4 - core index']
  #allocation1 [shape = 'u32[144,128]{1,0:T(1,128)}', space=vmem, size = 0x12000, scoped, tag = 'internal scratch']
  %s0 = inlined_call_operand.hbm [shape: f32[16,16], index: 0, kind: input, shape index: {}]
  %s1 = inlined_call_operand.hbm [shape: f32[16,128], index: 1, kind: input, shape index: {}]
  %s2 = inlined_call_operand.vmem [shape: f32[1,128], index: 2, kind: input, shape index: {}]
  %s3 = inlined_call_operand.hbm [shape: f32[16,128], index: 3, kind: output, shape index: {}]
  %s4 = sld [smem:[#allocation0]]
  $region30: #{linear_overtime.1} parent=0
    _
  %s6 = ssub.s32 1, %s4
  %s7 = scalar_select 0, %s6, %s4
  $region1: #{linear_overtime.1} parent=0
    #allocation2 [shape = 'u8[8192]{0}', space=vmem, size = 0x2000, scoped, tag = 'input window, operand 0, single buffered']
    #allocation3 [shape = 's32[1]{0}', space=sflag, size = 0x4, scoped, tag = 'scoped memory for linear_overtime.1']
    #allocation4 [shape = 's32[1]{0}', space=sflag, size = 0x4, scoped, tag = 'scoped memory for linear_overtime.1']
    #allocation5 [shape = 'u8[8192]{0}', space=vmem, size = 0x2000, scoped, tag = 'input window, operand 1, single buffered']
    #allocation6 [shape = 's32[1]{0}', space=sflag, size = 0x4, scoped, tag = 'scoped memory for linear_overtime.1']
    #allocation7 [shape = 'u8[8192]{0}', space=vmem, size = 0x2000, scoped, tag = 'output window, operand 0, single buffered']
    %8 = vsyncpa [#allocation3], 0
    %9 = vsyncpa [#allocation6], 0
    %10 = vsyncpa [#allocation4], 0
    // Predicated region
    $region2: #{linear_overtime.1} parent=1 // pred_check
      _
    $region3: #{linear_overtime.1} parent=1 // pred_check_branch
      %12 = sbr.rel (0) target = $region5
    $region4: #{linear_overtime.1} parent=1 // pred_region
      %s14 = ssub.s32 256, 256
      %15 = vsyncadd [#allocation3], %s14
      %s16 = sshll.u32 [#allocation2], 4
      %s17 = int_to_ptr.vmem [resolvable:$true] %s16
      %22 = dma.hbm_to_vmem [thread:$0]  %s0, 256, %s17, [#allocation3], 128, 128, 8
    $region5: #{linear_overtime.1} parent=1 // pred_fallthru
      _
    // Predicated region
    $region6: #{linear_overtime.1} parent=1 // pred_check
      _
    $region7: #{linear_overtime.1} parent=1 // pred_check_branch
      %24 = sbr.rel (0) target = $region9
    $region8: #{linear_overtime.1} parent=1 // pred_region
      %s26 = ssub.s32 256, 256
      %27 = vsyncadd [#allocation6], %s26
      %s28 = sshll.u32 [#allocation5], 4
      %s29 = int_to_ptr.vmem [resolvable:$true] %s28
      %34 = dma.hbm_to_vmem [thread:$0]  %s1, 256, %s29, [#allocation6], 128, 128, 8
    $region9: #{linear_overtime.1} parent=1 // pred_fallthru
      _
    // Predicated region
    $region10: #{linear_overtime.1} parent=1 // pred_check
      _
    $region11: #{linear_overtime.1} parent=1 // pred_check_branch
      %36 = sbr.rel (0) target = $region13
    $region12: #{linear_overtime.1} parent=1 // pred_region
      _
    $region13: #{linear_overtime.1} parent=1 // pred_fallthru
      _
    // Predicated region
    $region14: #{linear_overtime.1} parent=1 // pred_check
      _
    $region15: #{linear_overtime.1} parent=1 // pred_check_branch
      %38 = sbr.rel (0) target = $region17
    $region16: #{linear_overtime.1} parent=1 // pred_region
      %39 = dma.done [#allocation3], 256
    $region17: #{linear_overtime.1} parent=1 // pred_fallthru
      _
    // Predicated region
    $region18: #{linear_overtime.1} parent=1 // pred_check
      _
    $region19: #{linear_overtime.1} parent=1 // pred_check_branch
      %41 = sbr.rel (0) target = $region21
    $region20: #{linear_overtime.1} parent=1 // pred_region
      %42 = dma.done [#allocation6], 256
    $region21: #{linear_overtime.1} parent=1 // pred_fallthru
      _
    %v43 = vld [vmem:[#allocation2] sm:$0xff]
    %v44 = vld [vmem:[#allocation2 + $0x8] sm:$0xff]
    %v45 = vld [vmem:[#allocation5] sm:$0xff]
    %v46 = vld [vmem:[#allocation5 + $0x8] sm:$0xff]
    %s47 = smul.u32 0, 128
    %s48 = sshra.s32 %s47, 7
    %s49 = sand.u32 %s47, 127
    %s50 = scalar_lea.vmem %s2, %s48
    %v51 = vld [vmem:[%s50] sm:$0x1]
    %v53 = vlaneseq
    %v54 = vshrl.u32 %v53, 7
    %v55 = vsub.s32 0, %v54
    %v56 = vrot.slane %v51, %v55
    %vm58 = vcmask 130048
    %v60 = vsel %vm58, %v43, 0
    %v63 = vsel %vm58, %v44, 0
    %65 = vmatprep.subr.mxu0 0.0
    %v66 = vand.u32 %v45, 4294901760
    %67 = vmatpush1.msra.mxu0 %v66
    %68 = vmatprep.subr.mxu0 0.0
    %v69 = vand.u32 %v46, 4294901760
    %70 = vmatpush1.msra.mxu0 %v69
    %71 = vmatprep.subr.mxu0 0.0
    %72 = vmatpush1.msra.mxu0 0.0
    %73 = vmatprep.subr.mxu0 0.0
    %74 = vmatpush1.msra.mxu0 0.0
    %75 = vmatprep.subr.mxu0 0.0
    %76 = vmatpush1.msra.mxu0 0.0
    %77 = vmatprep.subr.mxu0 0.0
    %78 = vmatpush1.msra.mxu0 0.0
    %79 = vmatprep.subr.mxu0 0.0
    %80 = vmatpush1.msra.mxu0 0.0
    %81 = vmatprep.subr.mxu0 0.0
    %82 = vmatpush1.msra.mxu0 0.0
    %83 = vmatprep.subr.mxu0 0.0
    %84 = vmatpush1.msra.mxu0 0.0
    %85 = vmatprep.subr.mxu0 0.0
    %86 = vmatpush1.msra.mxu0 0.0
    %87 = vmatprep.subr.mxu0 0.0
    %88 = vmatpush1.msra.mxu0 0.0
    %89 = vmatprep.subr.mxu0 0.0
    %90 = vmatpush1.msra.mxu0 0.0
    %91 = vmatprep.subr.mxu0 0.0
    %92 = vmatpush1.msra.mxu0 0.0
    %93 = vmatprep.subr.mxu0 0.0
    %94 = vmatpush1.msra.mxu0 0.0
    %95 = vmatprep.subr.mxu0 0.0
    %96 = vmatpush1.msra.mxu0 0.0
    %97 = vmatprep.subr.mxu0 0.0
    %98 = vmatpush1.msra.mxu0 0.0
    %99 = vmatprep.subr.mxu0 0.0
    %100 = vmatpush1.msra.mxu0 0.0
    %101 = vmatprep.subr.mxu0 0.0
    %102 = vmatpush1.msra.mxu0 0.0
    %103 = vmatprep.subr.mxu0 0.0
    %104 = vmatpush1.msra.mxu0 0.0
    %105 = vmatprep.subr.mxu0 0.0
    %106 = vmatpush1.msra.mxu0 0.0
    %107 = vmatprep.subr.mxu0 0.0
    %108 = vmatpush1.msra.mxu0 0.0
    %109 = vmatprep.subr.mxu0 0.0
    %110 = vmatpush1.msra.mxu0 0.0
    %111 = vmatprep.subr.mxu0 0.0
    %112 = vmatpush1.msra.mxu0 0.0
    %113 = vmatprep.subr.mxu0 0.0
    %114 = vmatpush1.msra.mxu0 0.0
    %115 = vmatprep.subr.mxu0 0.0
    %116 = vmatpush1.msra.mxu0 0.0
    %117 = vmatprep.subr.mxu0 0.0
    %118 = vmatpush1.msra.mxu0 0.0
    %119 = vmatprep.subr.mxu0 0.0
    %120 = vmatpush1.msra.mxu0 0.0
    %121 = vmatprep.subr.mxu0 0.0
    %122 = vmatpush1.msra.mxu0 0.0
    %123 = vmatprep.subr.mxu0 0.0
    %124 = vmatpush1.msra.mxu0 0.0
    %125 = vmatprep.subr.mxu0 0.0
    %126 = vmatpush1.msra.mxu0 0.0
    %127 = vmatprep.subr.mxu0 0.0
    %128 = vmatpush1.msra.mxu0 0.0
    %129 = vmatprep.subr.mxu0 0.0
    %130 = vmatpush1.msra.mxu0 0.0
    %131 = vmatprep.mubr.f32.mxu0 0.0
    %v132 = vand.u32 %v60, 4294901760
    %v133 = vsub.f32 %v60, %v132
    %v134 = vand.u32 %v133, 4294901760
    %v135 = vsub.f32 %v133, %v134
    %v136 = vand.u32 %v135, 4294901760
    %137 = vmatmul.mubr.f32.gmra.mrb[0].mxu0 %v136
    %v138 = vpop.f32.mrb[0].mxu0
    %v139 = vadd.f32 %v56, %v138
    %v140 = vpop.f32.mrb[0].mxu0
    %141 = vmatprep.mubr.f32.mxu0 0.0
    %v142 = vand.u32 %v63, 4294901760
    %v143 = vsub.f32 %v63, %v142
    %v144 = vand.u32 %v143, 4294901760
    %v145 = vsub.f32 %v143, %v144
    %v146 = vand.u32 %v145, 4294901760
    %147 = vmatmul.mubr.f32.gmra.mrb[0].mxu0 %v146
    %v148 = vpop.f32.mrb[0].mxu0
    %v149 = vadd.f32 %v56, %v148
    %v150 = vpop.f32.mrb[0].mxu0
    %151 = vdwg.mxu0
    %152 = vmatprep.subr.mxu0 0.0
    %v153 = vand.u32 %v45, 4294901760
    %v154 = vsub.f32 %v45, %v153
    %v155 = vand.u32 %v154, 4294901760
    %v156 = vsub.f32 %v154, %v155
    %v157 = vand.u32 %v156, 4294901760
    %158 = vmatpush1.msra.mxu0 %v157
    %159 = vmatprep.subr.mxu0 0.0
    %v160 = vand.u32 %v46, 4294901760
    %v161 = vsub.f32 %v46, %v160
    %v162 = vand.u32 %v161, 4294901760
    %v163 = vsub.f32 %v161, %v162
    %v164 = vand.u32 %v163, 4294901760
    %165 = vmatpush1.msra.mxu0 %v164
    %166 = vmatprep.subr.mxu0 0.0
    %167 = vmatpush1.msra.mxu0 0.0
    %168 = vmatprep.subr.mxu0 0.0
    %169 = vmatpush1.msra.mxu0 0.0
    %170 = vmatprep.subr.mxu0 0.0
    %171 = vmatpush1.msra.mxu0 0.0
    %172 = vmatprep.subr.mxu0 0.0
    %173 = vmatpush1.msra.mxu0 0.0
    %174 = vmatprep.subr.mxu0 0.0
    %175 = vmatpush1.msra.mxu0 0.0
    %176 = vmatprep.subr.mxu0 0.0
    %177 = vmatpush1.msra.mxu0 0.0
    %178 = vmatprep.subr.mxu0 0.0
    %179 = vmatpush1.msra.mxu0 0.0
    %180 = vmatprep.subr.mxu0 0.0
    %181 = vmatpush1.msra.mxu0 0.0
    %182 = vmatprep.subr.mxu0 0.0
    %183 = vmatpush1.msra.mxu0 0.0
    %184 = vmatprep.subr.mxu0 0.0
    %185 = vmatpush1.msra.mxu0 0.0
    %186 = vmatprep.subr.mxu0 0.0
    %187 = vmatpush1.msra.mxu0 0.0
    %188 = vmatprep.subr.mxu0 0.0
    %189 = vmatpush1.msra.mxu0 0.0
    %190 = vmatprep.subr.mxu0 0.0
    %191 = vmatpush1.msra.mxu0 0.0
    %192 = vmatprep.subr.mxu0 0.0
    %193 = vmatpush1.msra.mxu0 0.0
    %194 = vmatprep.subr.mxu0 0.0
    %195 = vmatpush1.msra.mxu0 0.0
    %196 = vmatprep.subr.mxu0 0.0
    %197 = vmatpush1.msra.mxu0 0.0
    %198 = vmatprep.subr.mxu0 0.0
    %199 = vmatpush1.msra.mxu0 0.0
    %200 = vmatprep.subr.mxu0 0.0
    %201 = vmatpush1.msra.mxu0 0.0
    %202 = vmatprep.subr.mxu0 0.0
    %203 = vmatpush1.msra.mxu0 0.0
    %204 = vmatprep.subr.mxu0 0.0
    %205 = vmatpush1.msra.mxu0 0.0
    %206 = vmatprep.subr.mxu0 0.0
    %207 = vmatpush1.msra.mxu0 0.0
    %208 = vmatprep.subr.mxu0 0.0
    %209 = vmatpush1.msra.mxu0 0.0
    %210 = vmatprep.subr.mxu0 0.0
    %211 = vmatpush1.msra.mxu0 0.0
    %212 = vmatprep.subr.mxu0 0.0
    %213 = vmatpush1.msra.mxu0 0.0
    %214 = vmatprep.subr.mxu0 0.0
    %215 = vmatpush1.msra.mxu0 0.0
    %216 = vmatprep.subr.mxu0 0.0
    %217 = vmatpush1.msra.mxu0 0.0
    %218 = vmatprep.subr.mxu0 0.0
    %219 = vmatpush1.msra.mxu0 0.0
    %220 = vmatprep.subr.mxu0 0.0
    %221 = vmatpush1.msra.mxu0 0.0
    %222 = vmatprep.subr.mxu0 0.0
    %223 = vmatpush1.msra.mxu0 0.0
    %224 = vmatprep.subr.mxu0 0.0
    %225 = vmatpush1.msra.mxu0 0.0
    %226 = vmatprep.mubr.f32.mxu0 0.0
    %v227 = vand.u32 %v60, 4294901760
    %228 = vmatmul.mubr.f32.gmra.mrb[0].mxu0 %v227
    %v229 = vpop.f32.mrb[0].mxu0
    %v230 = vadd.f32 %v139, %v229
    %v231 = vpop.f32.mrb[0].mxu0
    %232 = vmatprep.mubr.f32.mxu0 0.0
    %v233 = vand.u32 %v63, 4294901760
    %234 = vmatmul.mubr.f32.gmra.mrb[0].mxu0 %v233
    %v235 = vpop.f32.mrb[0].mxu0
    %v236 = vadd.f32 %v149, %v235
    %v237 = vpop.f32.mrb[0].mxu0
    %238 = vdwg.mxu0
    %239 = vmatprep.subr.mxu0 0.0
    %v240 = vand.u32 %v45, 4294901760
    %v241 = vsub.f32 %v45, %v240
    %242 = vmatpush1.msra.mxu0 %v241
    %243 = vmatprep.subr.mxu0 0.0
    %v244 = vand.u32 %v46, 4294901760
    %v245 = vsub.f32 %v46, %v244
    %246 = vmatpush1.msra.mxu0 %v245
    %247 = vmatprep.subr.mxu0 0.0
    %248 = vmatpush1.msra.mxu0 0.0
    %249 = vmatprep.subr.mxu0 0.0
    %250 = vmatpush1.msra.mxu0 0.0
    %251 = vmatprep.subr.mxu0 0.0
    %252 = vmatpush1.msra.mxu0 0.0
    %253 = vmatprep.subr.mxu0 0.0
    %254 = vmatpush1.msra.mxu0 0.0
    %255 = vmatprep.subr.mxu0 0.0
    %256 = vmatpush1.msra.mxu0 0.0
    %257 = vmatprep.subr.mxu0 0.0
    %258 = vmatpush1.msra.mxu0 0.0
    %259 = vmatprep.subr.mxu0 0.0
    %260 = vmatpush1.msra.mxu0 0.0
    %261 = vmatprep.subr.mxu0 0.0
    %262 = vmatpush1.msra.mxu0 0.0
    %263 = vmatprep.subr.mxu0 0.0
    %264 = vmatpush1.msra.mxu0 0.0
    %265 = vmatprep.subr.mxu0 0.0
    %266 = vmatpush1.msra.mxu0 0.0
    %267 = vmatprep.subr.mxu0 0.0
    %268 = vmatpush1.msra.mxu0 0.0
    %269 = vmatprep.subr.mxu0 0.0
    %270 = vmatpush1.msra.mxu0 0.0
    %271 = vmatprep.subr.mxu0 0.0
    %272 = vmatpush1.msra.mxu0 0.0
    %273 = vmatprep.subr.mxu0 0.0
    %274 = vmatpush1.msra.mxu0 0.0
    %275 = vmatprep.subr.mxu0 0.0
    %276 = vmatpush1.msra.mxu0 0.0
    %277 = vmatprep.subr.mxu0 0.0
    %278 = vmatpush1.msra.mxu0 0.0
    %279 = vmatprep.subr.mxu0 0.0
    %280 = vmatpush1.msra.mxu0 0.0
    %281 = vmatprep.subr.mxu0 0.0
    %282 = vmatpush1.msra.mxu0 0.0
    %283 = vmatprep.subr.mxu0 0.0
    %284 = vmatpush1.msra.mxu0 0.0
    %285 = vmatprep.subr.mxu0 0.0
    %286 = vmatpush1.msra.mxu0 0.0
    %287 = vmatprep.subr.mxu0 0.0
    %288 = vmatpush1.msra.mxu0 0.0
    %289 = vmatprep.subr.mxu0 0.0
    %290 = vmatpush1.msra.mxu0 0.0
    %291 = vmatprep.subr.mxu0 0.0
    %292 = vmatpush1.msra.mxu0 0.0
    %293 = vmatprep.subr.mxu0 0.0
    %294 = vmatpush1.msra.mxu0 0.0
    %295 = vmatprep.subr.mxu0 0.0
    %296 = vmatpush1.msra.mxu0 0.0
    %297 = vmatprep.subr.mxu0 0.0
    %298 = vmatpush1.msra.mxu0 0.0
    %299 = vmatprep.subr.mxu0 0.0
    %300 = vmatpush1.msra.mxu0 0.0
    %301 = vmatprep.subr.mxu0 0.0
    %302 = vmatpush1.msra.mxu0 0.0
    %303 = vmatprep.subr.mxu0 0.0
    %304 = vmatpush1.msra.mxu0 0.0
    %305 = vmatprep.subr.mxu0 0.0
    %306 = vmatpush1.msra.mxu0 0.0
    %307 = vmatprep.mubr.f32.mxu0 0.0
    %v308 = vand.u32 %v60, 4294901760
    %v309 = vsub.f32 %v60, %v308
    %310 = vmatmul.mubr.f32.gmra.mrb[0].mxu0 %v309
    %v311 = vpop.f32.mrb[0].mxu0
    %v312 = vadd.f32 %v230, %v311
    %v313 = vpop.f32.mrb[0].mxu0
    %314 = vmatprep.mubr.f32.mxu0 0.0
    %v315 = vand.u32 %v63, 4294901760
    %v316 = vsub.f32 %v63, %v315
    %317 = vmatmul.mubr.f32.gmra.mrb[0].mxu0 %v316
    %v318 = vpop.f32.mrb[0].mxu0
    %v319 = vadd.f32 %v236, %v318
    %v320 = vpop.f32.mrb[0].mxu0
    %321 = vdwg.mxu0
    %322 = vmatprep.subr.mxu0 0.0
    %v323 = vand.u32 %v45, 4294901760
    %324 = vmatpush1.msra.mxu0 %v323
    %325 = vmatprep.subr.mxu0 0.0
    %v326 = vand.u32 %v46, 4294901760
    %327 = vmatpush1.msra.mxu0 %v326
    %328 = vmatprep.subr.mxu0 0.0
    %329 = vmatpush1.msra.mxu0 0.0
    %330 = vmatprep.subr.mxu0 0.0
    %331 = vmatpush1.msra.mxu0 0.0
    %332 = vmatprep.subr.mxu0 0.0
    %333 = vmatpush1.msra.mxu0 0.0
    %334 = vmatprep.subr.mxu0 0.0
    %335 = vmatpush1.msra.mxu0 0.0
    %336 = vmatprep.subr.mxu0 0.0
    %337 = vmatpush1.msra.mxu0 0.0
    %338 = vmatprep.subr.mxu0 0.0
    %339 = vmatpush1.msra.mxu0 0.0
    %340 = vmatprep.subr.mxu0 0.0
    %341 = vmatpush1.msra.mxu0 0.0
    %342 = vmatprep.subr.mxu0 0.0
    %343 = vmatpush1.msra.mxu0 0.0
    %344 = vmatprep.subr.mxu0 0.0
    %345 = vmatpush1.msra.mxu0 0.0
    %346 = vmatprep.subr.mxu0 0.0
    %347 = vmatpush1.msra.mxu0 0.0
    %348 = vmatprep.subr.mxu0 0.0
    %349 = vmatpush1.msra.mxu0 0.0
    %350 = vmatprep.subr.mxu0 0.0
    %351 = vmatpush1.msra.mxu0 0.0
    %352 = vmatprep.subr.mxu0 0.0
    %353 = vmatpush1.msra.mxu0 0.0
    %354 = vmatprep.subr.mxu0 0.0
    %355 = vmatpush1.msra.mxu0 0.0
    %356 = vmatprep.subr.mxu0 0.0
    %357 = vmatpush1.msra.mxu0 0.0
    %358 = vmatprep.subr.mxu0 0.0
    %359 = vmatpush1.msra.mxu0 0.0
    %360 = vmatprep.subr.mxu0 0.0
    %361 = vmatpush1.msra.mxu0 0.0
    %362 = vmatprep.subr.mxu0 0.0
    %363 = vmatpush1.msra.mxu0 0.0
    %364 = vmatprep.subr.mxu0 0.0
    %365 = vmatpush1.msra.mxu0 0.0
    %366 = vmatprep.subr.mxu0 0.0
    %367 = vmatpush1.msra.mxu0 0.0
    %368 = vmatprep.subr.mxu0 0.0
    %369 = vmatpush1.msra.mxu0 0.0
    %370 = vmatprep.subr.mxu0 0.0
    %371 = vmatpush1.msra.mxu0 0.0
    %372 = vmatprep.subr.mxu0 0.0
    %373 = vmatpush1.msra.mxu0 0.0
    %374 = vmatprep.subr.mxu0 0.0
    %375 = vmatpush1.msra.mxu0 0.0
    %376 = vmatprep.subr.mxu0 0.0
    %377 = vmatpush1.msra.mxu0 0.0
    %378 = vmatprep.subr.mxu0 0.0
    %379 = vmatpush1.msra.mxu0 0.0
    %380 = vmatprep.subr.mxu0 0.0
    %381 = vmatpush1.msra.mxu0 0.0
    %382 = vmatprep.subr.mxu0 0.0
    %383 = vmatpush1.msra.mxu0 0.0
    %384 = vmatprep.subr.mxu0 0.0
    %385 = vmatpush1.msra.mxu0 0.0
    %386 = vmatprep.subr.mxu0 0.0
    %387 = vmatpush1.msra.mxu0 0.0
    %388 = vmatprep.mubr.f32.mxu0 0.0
    %v389 = vand.u32 %v60, 4294901760
    %v390 = vsub.f32 %v60, %v389
    %v391 = vand.u32 %v390, 4294901760
    %392 = vmatmul.mubr.f32.gmra.mrb[0].mxu0 %v391
    %v393 = vpop.f32.mrb[0].mxu0
    %v394 = vadd.f32 %v312, %v393
    %v395 = vpop.f32.mrb[0].mxu0
    %396 = vmatprep.mubr.f32.mxu0 0.0
    %v397 = vand.u32 %v63, 4294901760
    %v398 = vsub.f32 %v63, %v397
    %v399 = vand.u32 %v398, 4294901760
    %400 = vmatmul.mubr.f32.gmra.mrb[0].mxu0 %v399
    %v401 = vpop.f32.mrb[0].mxu0
    %v402 = vadd.f32 %v319, %v401
    %v403 = vpop.f32.mrb[0].mxu0
    %404 = vdwg.mxu0
    %405 = vmatprep.subr.mxu0 0.0
    %v406 = vand.u32 %v45, 4294901760
    %v407 = vsub.f32 %v45, %v406
    %v408 = vand.u32 %v407, 4294901760
    %409 = vmatpush1.msra.mxu0 %v408
    %410 = vmatprep.subr.mxu0 0.0
    %v411 = vand.u32 %v46, 4294901760
    %v412 = vsub.f32 %v46, %v411
    %v413 = vand.u32 %v412, 4294901760
    %414 = vmatpush1.msra.mxu0 %v413
    %415 = vmatprep.subr.mxu0 0.0
    %416 = vmatpush1.msra.mxu0 0.0
    %417 = vmatprep.subr.mxu0 0.0
    %418 = vmatpush1.msra.mxu0 0.0
    %419 = vmatprep.subr.mxu0 0.0
    %420 = vmatpush1.msra.mxu0 0.0
    %421 = vmatprep.subr.mxu0 0.0
    %422 = vmatpush1.msra.mxu0 0.0
    %423 = vmatprep.subr.mxu0 0.0
    %424 = vmatpush1.msra.mxu0 0.0
    %425 = vmatprep.subr.mxu0 0.0
    %426 = vmatpush1.msra.mxu0 0.0
    %427 = vmatprep.subr.mxu0 0.0
    %428 = vmatpush1.msra.mxu0 0.0
    %429 = vmatprep.subr.mxu0 0.0
    %430 = vmatpush1.msra.mxu0 0.0
    %431 = vmatprep.subr.mxu0 0.0
    %432 = vmatpush1.msra.mxu0 0.0
    %433 = vmatprep.subr.mxu0 0.0
    %434 = vmatpush1.msra.mxu0 0.0
    %435 = vmatprep.subr.mxu0 0.0
    %436 = vmatpush1.msra.mxu0 0.0
    %437 = vmatprep.subr.mxu0 0.0
    %438 = vmatpush1.msra.mxu0 0.0
    %439 = vmatprep.subr.mxu0 0.0
    %440 = vmatpush1.msra.mxu0 0.0
    %441 = vmatprep.subr.mxu0 0.0
    %442 = vmatpush1.msra.mxu0 0.0
    %443 = vmatprep.subr.mxu0 0.0
    %444 = vmatpush1.msra.mxu0 0.0
    %445 = vmatprep.subr.mxu0 0.0
    %446 = vmatpush1.msra.mxu0 0.0
    %447 = vmatprep.subr.mxu0 0.0
    %448 = vmatpush1.msra.mxu0 0.0
    %449 = vmatprep.subr.mxu0 0.0
    %450 = vmatpush1.msra.mxu0 0.0
    %451 = vmatprep.subr.mxu0 0.0
    %452 = vmatpush1.msra.mxu0 0.0
    %453 = vmatprep.subr.mxu0 0.0
    %454 = vmatpush1.msra.mxu0 0.0
    %455 = vmatprep.subr.mxu0 0.0
    %456 = vmatpush1.msra.mxu0 0.0
    %457 = vmatprep.subr.mxu0 0.0
    %458 = vmatpush1.msra.mxu0 0.0
    %459 = vmatprep.subr.mxu0 0.0
    %460 = vmatpush1.msra.mxu0 0.0
    %461 = vmatprep.subr.mxu0 0.0
    %462 = vmatpush1.msra.mxu0 0.0
    %463 = vmatprep.subr.mxu0 0.0
    %464 = vmatpush1.msra.mxu0 0.0
    %465 = vmatprep.subr.mxu0 0.0
    %466 = vmatpush1.msra.mxu0 0.0
    %467 = vmatprep.subr.mxu0 0.0
    %468 = vmatpush1.msra.mxu0 0.0
    %469 = vmatprep.subr.mxu0 0.0
    %470 = vmatpush1.msra.mxu0 0.0
    %471 = vmatprep.subr.mxu0 0.0
    %472 = vmatpush1.msra.mxu0 0.0
    %473 = vmatprep.subr.mxu0 0.0
    %474 = vmatpush1.msra.mxu0 0.0
    %475 = vmatprep.mubr.f32.mxu0 0.0
    %v476 = vand.u32 %v60, 4294901760
    %477 = vmatmul.mubr.f32.gmra.mrb[0].mxu0 %v476
    %v478 = vpop.f32.mrb[0].mxu0
    %v479 = vadd.f32 %v394, %v478
    %v480 = vpop.f32.mrb[0].mxu0
    %481 = vmatprep.mubr.f32.mxu0 0.0
    %v482 = vand.u32 %v63, 4294901760
    %483 = vmatmul.mubr.f32.gmra.mrb[0].mxu0 %v482
    %v484 = vpop.f32.mrb[0].mxu0
    %v485 = vadd.f32 %v402, %v484
    %v486 = vpop.f32.mrb[0].mxu0
    %487 = vdwg.mxu0
    %488 = vmatprep.subr.mxu0 0.0
    %v489 = vand.u32 %v45, 4294901760
    %490 = vmatpush1.msra.mxu0 %v489
    %491 = vmatprep.subr.mxu0 0.0
    %v492 = vand.u32 %v46, 4294901760
    %493 = vmatpush1.msra.mxu0 %v492
    %494 = vmatprep.subr.mxu0 0.0
    %495 = vmatpush1.msra.mxu0 0.0
    %496 = vmatprep.subr.mxu0 0.0
    %497 = vmatpush1.msra.mxu0 0.0
    %498 = vmatprep.subr.mxu0 0.0
    %499 = vmatpush1.msra.mxu0 0.0
    %500 = vmatprep.subr.mxu0 0.0
    %501 = vmatpush1.msra.mxu0 0.0
    %502 = vmatprep.subr.mxu0 0.0
    %503 = vmatpush1.msra.mxu0 0.0
    %504 = vmatprep.subr.mxu0 0.0
    %505 = vmatpush1.msra.mxu0 0.0
    %506 = vmatprep.subr.mxu0 0.0
    %507 = vmatpush1.msra.mxu0 0.0
    %508 = vmatprep.subr.mxu0 0.0
    %509 = vmatpush1.msra.mxu0 0.0
    %510 = vmatprep.subr.mxu0 0.0
    %511 = vmatpush1.msra.mxu0 0.0
    %512 = vmatprep.subr.mxu0 0.0
    %513 = vmatpush1.msra.mxu0 0.0
    %514 = vmatprep.subr.mxu0 0.0
    %515 = vmatpush1.msra.mxu0 0.0
    %516 = vmatprep.subr.mxu0 0.0
    %517 = vmatpush1.msra.mxu0 0.0
    %518 = vmatprep.subr.mxu0 0.0
    %519 = vmatpush1.msra.mxu0 0.0
    %520 = vmatprep.subr.mxu0 0.0
    %521 = vmatpush1.msra.mxu0 0.0
    %522 = vmatprep.subr.mxu0 0.0
    %523 = vmatpush1.msra.mxu0 0.0
    %524 = vmatprep.subr.mxu0 0.0
    %525 = vmatpush1.msra.mxu0 0.0
    %526 = vmatprep.subr.mxu0 0.0
    %527 = vmatpush1.msra.mxu0 0.0
    %528 = vmatprep.subr.mxu0 0.0
    %529 = vmatpush1.msra.mxu0 0.0
    %530 = vmatprep.subr.mxu0 0.0
    %531 = vmatpush1.msra.mxu0 0.0
    %532 = vmatprep.subr.mxu0 0.0
    %533 = vmatpush1.msra.mxu0 0.0
    %534 = vmatprep.subr.mxu0 0.0
    %535 = vmatpush1.msra.mxu0 0.0
    %536 = vmatprep.subr.mxu0 0.0
    %537 = vmatpush1.msra.mxu0 0.0
    %538 = vmatprep.subr.mxu0 0.0
    %539 = vmatpush1.msra.mxu0 0.0
    %540 = vmatprep.subr.mxu0 0.0
    %541 = vmatpush1.msra.mxu0 0.0
    %542 = vmatprep.subr.mxu0 0.0
    %543 = vmatpush1.msra.mxu0 0.0
    %544 = vmatprep.subr.mxu0 0.0
    %545 = vmatpush1.msra.mxu0 0.0
    %546 = vmatprep.subr.mxu0 0.0
    %547 = vmatpush1.msra.mxu0 0.0
    %548 = vmatprep.subr.mxu0 0.0
    %549 = vmatpush1.msra.mxu0 0.0
    %550 = vmatprep.subr.mxu0 0.0
    %551 = vmatpush1.msra.mxu0 0.0
    %552 = vmatprep.subr.mxu0 0.0
    %553 = vmatpush1.msra.mxu0 0.0
    %554 = vmatprep.mubr.f32.mxu0 0.0
    %v555 = vand.u32 %v60, 4294901760
    %556 = vmatmul.mubr.f32.gmra.mrb[0].mxu0 %v555
    %v557 = vpop.f32.mrb[0].mxu0
    %v558 = vadd.f32 %v479, %v557
    %v559 = vpop.f32.mrb[0].mxu0
    %560 = vmatprep.mubr.f32.mxu0 0.0
    %v561 = vand.u32 %v63, 4294901760
    %562 = vmatmul.mubr.f32.gmra.mrb[0].mxu0 %v561
    %v563 = vpop.f32.mrb[0].mxu0
    %v564 = vadd.f32 %v485, %v563
    %v565 = vpop.f32.mrb[0].mxu0
    %566 = vdwg.mxu0
    %567 = vst [vmem:[#allocation7] sm:$0xff] %v558
    %568 = vst [vmem:[#allocation7 + $0x8] sm:$0xff] %v564
    // Predicated region
    $region22: #{linear_overtime.1} parent=1 // pred_check
      _
    $region23: #{linear_overtime.1} parent=1 // pred_check_branch
      %570 = sbr.rel (0) target = $region25
    $region24: #{linear_overtime.1} parent=1 // pred_region
      %s572 = ssub.s32 256, 256
      %573 = vsyncadd [#allocation4], %s572
      %s574 = sshll.u32 [#allocation7], 4
      %s575 = int_to_ptr.vmem [resolvable:$true] %s574
      %580 = dma.vmem_to_hbm [thread:$0]  %s575, 256, %s3, [#allocation4], 128, 128, 8
    $region25: #{linear_overtime.1} parent=1 // pred_fallthru
      _
    // Predicated region
    $region26: #{linear_overtime.1} parent=1 // pred_check
      _
    $region27: #{linear_overtime.1} parent=1 // pred_check_branch
      %582 = sbr.rel (0) target = $region29
    $region28: #{linear_overtime.1} parent=1 // pred_region
      %583 = dma.done [#allocation4], 256
    $region29: #{linear_overtime.1} parent=1 // pred_fallthru
      _
    %584 = vsyncpa [#allocation3], 1
    %585 = vsyncpa [#allocation6], 1
    %586 = vsyncpa [#allocation4], 1

</llo_original>
